<compile_context>
chip_gen: v7x
topology: tpu7x:2x2x1
jax: 0.10.0
libtpu: 0.0.40
codegen_flags: <defaults>
</compile_context>

<pallas_src>
import functools

import jax
import jax.numpy as jnp
from jax.experimental import pallas as pl
from jax.experimental.pallas import tpu as pltpu

BN_EPS = 1e-5
LANE = 128
SUBLANE = 8


def _round_up(n, m):
    return ((n + m - 1) // m) * m


def _pad2(a, shape, value=0.0):
    """Zero-pad (or constant-pad) a 2-D array up to `shape`."""
    return jnp.pad(a, [(0, shape[0] - a.shape[0]), (0, shape[1] - a.shape[1])],
                   constant_values=value)


def _bn_train(h, gamma, beta, row_sum, inv_b):
    """Training-mode BatchNorm1d (biased variance), single-pass sums.

    var = E[h^2] - mean^2 (clamped at 0).  Acceptable here: h is post-ReLU,
    O(1)-scaled, and the batch is small; the two sums are independent, removing
    the serialized second reduction of the two-pass form.
    """
    s1 = row_sum(h)
    s2 = row_sum(h * h)
    mean = s1 * inv_b
    var = jnp.maximum(s2 * inv_b - mean * mean, 0.0)
    return (h - mean) * jax.lax.rsqrt(var + BN_EPS) * gamma + beta


def affine_coupling_kernel(x1_ref, x2_ref, bmask_ref,
                           w1_ref, b1_ref, g1_ref, be1_ref,
                           w2_ref, b2_ref, g2_ref, be2_ref,
                           w3_ref, b3_ref,
                           y2_ref, logdet_ref,
                           *, d2p: int, inv_b: float, mask_batch: bool):
    x2 = x2_ref[...].astype(jnp.float32)              # (Bp, d2p) lane-padded, f32
    mm_dtype = w1_ref.dtype                            # bf16 (perf) or f32 (verify)
    inv_b = jnp.float32(inv_b)

    if mask_batch:
        # Zero out padded batch rows so per-batch BN stats stay exact.
        bmask = bmask_ref[...]                         # (Bp, 1) in {0., 1.}
        row_sum = lambda a: jnp.sum(a * bmask, axis=0, keepdims=True)
    else:
        row_sum = lambda a: jnp.sum(a, axis=0, keepdims=True)

    # ---- Linear(d1 -> H) + ReLU + BatchNorm1d (training / per-batch stats) ----
    h = jnp.dot(x1_ref[...], w1_ref[...],
                preferred_element_type=jnp.float32) + b1_ref[...]
    h = jnp.maximum(h, 0.0)
    h = _bn_train(h, g1_ref[...], be1_ref[...], row_sum, inv_b)

    # ---- Linear(H -> H) + ReLU + BatchNorm1d ----
    h = jnp.dot(h.astype(mm_dtype), w2_ref[...],
                preferred_element_type=jnp.float32) + b2_ref[...]
    h = jnp.maximum(h, 0.0)
    h = _bn_train(h, g2_ref[...], be2_ref[...], row_sum, inv_b)

    # ---- Final Linear: ONE fused (Hp, 2*d2p) matmul, then 128-aligned split ----
    out = jnp.dot(h.astype(mm_dtype), w3_ref[...],
                  preferred_element_type=jnp.float32) + b3_ref[...]
    log_s = out[:, :d2p]                               # tile-aligned static slices
    t = out[:, d2p:]

    # ---- affine coupling:  y2 = sigmoid(log_s + 2) * x2 + t ----
    z = log_s + 2.0
    s = jax.nn.sigmoid(z)
    y2_ref[...] = (s * x2 + t).astype(y2_ref.dtype)

    # Stable log(sigmoid(z)) = -(max(-z,0) + log(1+exp(-|z|))).  Padded lanes of
    # the log_s bias are +30, so their contribution is < 2e-14/lane -> no lane mask.
    log_sig = -(jnp.maximum(-z, 0.0) + jnp.log(1.0 + jnp.exp(-jnp.abs(z))))
    logdet_ref[...] = jnp.sum(log_sig, axis=1, keepdims=True).astype(logdet_ref.dtype)
    # NOTE: (Bp, 1) logdet output is a masked partial store; fine for one layer,
    # but pack logdets of many layers into a lane-dense slab if fusing layers.


def affine_coupling_forward(x, params, *, use_bf16_matmuls=True):
    """x: (B, dim) float32.  Returns (y: (B, dim), logdet: (B,))."""
    B, dim = x.shape
    assert dim % 2 == 0, "AffineCoupling needs even dim (torch.split([d2, d2]))"
    d1 = dim // 2
    d2 = dim - d1
    H = params["w1"].shape[1]

    Bp = _round_up(B, SUBLANE)
    d1p = _round_up(d1, LANE)
    d2p = _round_up(d2, LANE)
    Hp = _round_up(H, LANE)

    mm_dtype = jnp.bfloat16 if use_bf16_matmuls else x.dtype

    # Split in the wrapper; y1 == x1 never enters the kernel.
    x1 = x[:, :d1]
    x2 = x[:, d1:]

    # Fused final layer: [log_s half | t half] along lanes, each half padded to
    # d2p.  Dead lanes of the log_s bias are +30 so log(sigmoid(.+2)) ~ 0 there.
    w3, b3 = params["w3"], params["b3"]
    w3f = jnp.concatenate([_pad2(w3[:, :d2], (Hp, d2p)),
                           _pad2(w3[:, d2:2 * d2], (Hp, d2p))], axis=1)
    b3f = jnp.concatenate([_pad2(b3[:, :d2], (1, d2p), value=30.0),
                           _pad2(b3[:, d2:2 * d2], (1, d2p))], axis=1)

    mask_batch = (Bp != B)
    bmask = (jnp.arange(Bp) < B).astype(jnp.float32).reshape(Bp, 1)

    args = (
        _pad2(x1, (Bp, d1p)).astype(mm_dtype),
        _pad2(x2, (Bp, d2p)),
        bmask,
        _pad2(params["w1"], (d1p, Hp)).astype(mm_dtype),
        _pad2(params["b1"], (1, Hp)),
        _pad2(params["g1"], (1, Hp)),
        _pad2(params["be1"], (1, Hp)),
        _pad2(params["w2"], (Hp, Hp)).astype(mm_dtype),
        _pad2(params["b2"], (1, Hp)),
        _pad2(params["g2"], (1, Hp)),
        _pad2(params["be2"], (1, Hp)),
        w3f.astype(mm_dtype),
        b3f,
    )

    # Explicit VMEM budget from the live set (v7x scoped default is 32 MiB).
    out_bytes = Bp * d2p * x.dtype.itemsize + Bp * 4
    in_bytes = sum(int(a.size) * a.dtype.itemsize for a in args)
    interm_bytes = 4 * (Bp * Hp + Bp * 2 * d2p) * 4      # h, out, BN temporaries
    vmem_limit = int(min(32 << 20,
                         max(16 << 20, 2 * (in_bytes + out_bytes + interm_bytes))))

    def full_spec(shape):
        nd = len(shape)
        return pl.BlockSpec(shape, lambda *, _nd=nd: (0,) * _nd)

    y2p, logdet = pl.pallas_call(
        functools.partial(affine_coupling_kernel,
                          d2p=d2p, inv_b=1.0 / B, mask_batch=mask_batch),
        out_shape=(jax.ShapeDtypeStruct((Bp, d2p), x.dtype),
                   jax.ShapeDtypeStruct((Bp, 1), jnp.float32)),
        grid=(),
        in_specs=[full_spec(a.shape) for a in args],
        out_specs=(full_spec((Bp, d2p)), full_spec((Bp, 1))),
        compiler_params=pltpu.CompilerParams(vmem_limit_bytes=vmem_limit),
    )(*args)

    y2 = y2p[:B, :d2].astype(x.dtype)
    y = jnp.concatenate([x1, y2], axis=1)              # y1 passthrough at XLA level
    return y, logdet[:B, 0]


def init_params(key, dim, hidden_dim):
    d1 = dim // 2
    ks = jax.random.split(key, 6)
    scale1 = 1.0 / jnp.sqrt(d1)
    scale2 = 1.0 / jnp.sqrt(hidden_dim)
    return {
        # Linear weights stored as (in, out) so the kernel does x @ W + b.
        "w1": jax.random.uniform(ks[0], (d1, hidden_dim), jnp.float32, -scale1, scale1),
        "b1": jax.random.uniform(ks[1], (1, hidden_dim), jnp.float32, -scale1, scale1),
        "g1": jnp.ones((1, hidden_dim), jnp.float32),
        "be1": jnp.zeros((1, hidden_dim), jnp.float32),
        "w2": jax.random.uniform(ks[2], (hidden_dim, hidden_dim), jnp.float32, -scale2, scale2),
        "b2": jax.random.uniform(ks[3], (1, hidden_dim), jnp.float32, -scale2, scale2),
        "g2": jnp.ones((1, hidden_dim), jnp.float32),
        "be2": jnp.zeros((1, hidden_dim), jnp.float32),
        "w3": jax.random.uniform(ks[4], (hidden_dim, dim), jnp.float32, -scale2, scale2),
        "b3": jax.random.uniform(ks[5], (1, dim), jnp.float32, -scale2, scale2),
    }


def reference_forward(x, params):
    """Pure-JAX reference mirroring the PyTorch forward (training-mode BN)."""
    dim = x.shape[1]
    d1 = dim // 2
    x1, x2 = x[:, :d1], x[:, d1:]

    def bn(h, g, b):
        mu = jnp.mean(h, axis=0, keepdims=True)
        var = jnp.mean((h - mu) ** 2, axis=0, keepdims=True)
        return (h - mu) / jnp.sqrt(var + BN_EPS) * g + b

    h = jnp.maximum(x1 @ params["w1"] + params["b1"], 0.0)
    h = bn(h, params["g1"], params["be1"])
    h = jnp.maximum(h @ params["w2"] + params["b2"], 0.0)
    h = bn(h, params["g2"], params["be2"])
    out = h @ params["w3"] + params["b3"]
    d2 = dim - d1
    log_s, t = out[:, :d2], out[:, d2:2 * d2]
    s = jax.nn.sigmoid(log_s + 2.0)
    y = jnp.concatenate([x1, s * x2 + t], axis=1)
    return y, jnp.sum(jnp.log(s), axis=1)


if __name__ == "__main__":
    B, dim, hidden_dim = 16, 8, 32

    key = jax.random.PRNGKey(0)
    kx, kp = jax.random.split(key)
    x = jax.random.normal(kx, (B, dim), jnp.float32)
    params = init_params(kp, dim, hidden_dim)
    y_ref, ld_ref = reference_forward(x, params)

    # 1) f32 matmul path (verification; tight tolerance).
    y, ld = affine_coupling_forward(x, params, use_bf16_matmuls=False)
    jax.block_until_ready((y, ld))
    assert jnp.allclose(y, y_ref, atol=1e-4, rtol=1e-4)
    assert jnp.allclose(ld, ld_ref, atol=1e-4, rtol=1e-4)

    # 2) bf16-operand matmul path (performance default; bf16-level tolerance).
    yb, ldb = affine_coupling_forward(x, params, use_bf16_matmuls=True)
    jax.block_until_ready((yb, ldb))
    assert jnp.allclose(yb, y_ref, atol=2e-1, rtol=2e-1)
    assert jnp.allclose(ldb, ld_ref, atol=2e-1, rtol=2e-1)

    # 3) Non-multiple-of-8 batch exercises the padded-row BN mask path.
    x_odd = x[:12]
    y_odd, ld_odd = affine_coupling_forward(x_odd, params, use_bf16_matmuls=False)
    jax.block_until_ready((y_odd, ld_odd))
    y_ref_o, ld_ref_o = reference_forward(x_odd, params)
    assert jnp.allclose(y_odd, y_ref_o, atol=1e-4, rtol=1e-4)
    assert jnp.allclose(ld_odd, ld_ref_o, atol=1e-4, rtol=1e-4)

    print("KERNEL_OK")
</pallas_src>

<mosaic_0001>
module attributes {stable_mosaic.version = 11 : i64} {
  func.func @affine_coupling_kernel(%arg0: memref<16x128xf32, #tpu.memory_space<vmem>>, %arg1: memref<16x128xf32, #tpu.memory_space<vmem>>, %arg2: memref<16x1xf32, #tpu.memory_space<vmem>>, %arg3: memref<128x128xf32, #tpu.memory_space<vmem>>, %arg4: memref<1x128xf32, #tpu.memory_space<vmem>>, %arg5: memref<1x128xf32, #tpu.memory_space<vmem>>, %arg6: memref<1x128xf32, #tpu.memory_space<vmem>>, %arg7: memref<128x128xf32, #tpu.memory_space<vmem>>, %arg8: memref<1x128xf32, #tpu.memory_space<vmem>>, %arg9: memref<1x128xf32, #tpu.memory_space<vmem>>, %arg10: memref<1x128xf32, #tpu.memory_space<vmem>>, %arg11: memref<128x256xf32, #tpu.memory_space<vmem>>, %arg12: memref<1x256xf32, #tpu.memory_space<vmem>>, %arg13: memref<16x128xf32, #tpu.memory_space<vmem>>, %arg14: memref<16x1xf32, #tpu.memory_space<vmem>>) attributes {dimension_semantics = [], scalar_prefetch = 0 : i64, scratch_operands = 0 : i64, tpu.core_type = #tpu.core_type<tc>} {
    %c0 = arith.constant 0 : index
    %c0_0 = arith.constant 0 : index
    %0 = vector.load %arg1[%c0, %c0_0] : memref<16x128xf32, #tpu.memory_space<vmem>>, vector<16x128xf32>
    %c0_1 = arith.constant 0 : index
    %c0_2 = arith.constant 0 : index
    %1 = vector.load %arg0[%c0_1, %c0_2] : memref<16x128xf32, #tpu.memory_space<vmem>>, vector<16x128xf32>
    %c0_3 = arith.constant 0 : index
    %c0_4 = arith.constant 0 : index
    %2 = vector.load %arg3[%c0_3, %c0_4] : memref<128x128xf32, #tpu.memory_space<vmem>>, vector<128x128xf32>
    %cst = arith.constant dense<0.000000e+00> : vector<16x128xf32>
    %3 = tpu.matmul %1, %2, %cst {dimension_numbers = #tpu.dot_dimension_numbers<[1], [0], [0], [1], [0, 0, 1, 1], [], []>} : vector<16x128xf32>, vector<128x128xf32>, vector<16x128xf32> -> vector<16x128xf32>
    %c0_5 = arith.constant 0 : index
    %c0_6 = arith.constant 0 : index
    %4 = vector.load %arg4[%c0_5, %c0_6] : memref<1x128xf32, #tpu.memory_space<vmem>>, vector<1x128xf32>
    %5 = vector.broadcast %4 : vector<1x128xf32> to vector<16x128xf32>
    %6 = arith.addf %3, %5 : vector<16x128xf32>
    %cst_7 = arith.constant 0.000000e+00 : f32
    %7 = vector.broadcast %cst_7 : f32 to vector<16x128xf32>
    %8 = arith.maximumf %6, %7 : vector<16x128xf32>
    %c0_8 = arith.constant 0 : index
    %c0_9 = arith.constant 0 : index
    %9 = vector.load %arg5[%c0_8, %c0_9] : memref<1x128xf32, #tpu.memory_space<vmem>>, vector<1x128xf32>
    %c0_10 = arith.constant 0 : index
    %c0_11 = arith.constant 0 : index
    %10 = vector.load %arg6[%c0_10, %c0_11] : memref<1x128xf32, #tpu.memory_space<vmem>>, vector<1x128xf32>
    %cst_12 = arith.constant dense<0.000000e+00> : vector<128xf32>
    %11 = vector.multi_reduction <add>, %8, %cst_12 [0] : vector<16x128xf32> to vector<128xf32>
    %12 = vector.shape_cast %11 : vector<128xf32> to vector<1x128xf32>
    %13 = arith.mulf %8, %8 : vector<16x128xf32>
    %cst_13 = arith.constant dense<0.000000e+00> : vector<128xf32>
    %14 = vector.multi_reduction <add>, %13, %cst_13 [0] : vector<16x128xf32> to vector<128xf32>
    %15 = vector.shape_cast %14 : vector<128xf32> to vector<1x128xf32>
    %cst_14 = arith.constant 6.250000e-02 : f32
    %16 = vector.broadcast %cst_14 : f32 to vector<1x128xf32>
    %17 = arith.mulf %12, %16 : vector<1x128xf32>
    %cst_15 = arith.constant 6.250000e-02 : f32
    %18 = vector.broadcast %cst_15 : f32 to vector<1x128xf32>
    %19 = arith.mulf %15, %18 : vector<1x128xf32>
    %20 = arith.mulf %17, %17 : vector<1x128xf32>
    %21 = arith.subf %19, %20 : vector<1x128xf32>
    %cst_16 = arith.constant 0.000000e+00 : f32
    %22 = vector.broadcast %cst_16 : f32 to vector<1x128xf32>
    %23 = arith.maximumf %21, %22 : vector<1x128xf32>
    %24 = vector.broadcast %17 : vector<1x128xf32> to vector<16x128xf32>
    %25 = arith.subf %8, %24 : vector<16x128xf32>
    %cst_17 = arith.constant 9.99999974E-6 : f32
    %26 = vector.broadcast %cst_17 : f32 to vector<1x128xf32>
    %27 = arith.addf %23, %26 : vector<1x128xf32>
    %28 = math.rsqrt %27 : vector<1x128xf32>
    %29 = vector.broadcast %28 : vector<1x128xf32> to vector<16x128xf32>
    %30 = arith.mulf %25, %29 : vector<16x128xf32>
    %31 = vector.broadcast %9 : vector<1x128xf32> to vector<16x128xf32>
    %32 = arith.mulf %30, %31 : vector<16x128xf32>
    %33 = vector.broadcast %10 : vector<1x128xf32> to vector<16x128xf32>
    %34 = arith.addf %32, %33 : vector<16x128xf32>
    %c0_18 = arith.constant 0 : index
    %c0_19 = arith.constant 0 : index
    %35 = vector.load %arg7[%c0_18, %c0_19] : memref<128x128xf32, #tpu.memory_space<vmem>>, vector<128x128xf32>
    %cst_20 = arith.constant dense<0.000000e+00> : vector<16x128xf32>
    %36 = tpu.matmul %34, %35, %cst_20 {dimension_numbers = #tpu.dot_dimension_numbers<[1], [0], [0], [1], [0, 0, 1, 1], [], []>} : vector<16x128xf32>, vector<128x128xf32>, vector<16x128xf32> -> vector<16x128xf32>
    %c0_21 = arith.constant 0 : index
    %c0_22 = arith.constant 0 : index
    %37 = vector.load %arg8[%c0_21, %c0_22] : memref<1x128xf32, #tpu.memory_space<vmem>>, vector<1x128xf32>
    %38 = vector.broadcast %37 : vector<1x128xf32> to vector<16x128xf32>
    %39 = arith.addf %36, %38 : vector<16x128xf32>
    %cst_23 = arith.constant 0.000000e+00 : f32
    %40 = vector.broadcast %cst_23 : f32 to vector<16x128xf32>
    %41 = arith.maximumf %39, %40 : vector<16x128xf32>
    %c0_24 = arith.constant 0 : index
    %c0_25 = arith.constant 0 : index
    %42 = vector.load %arg9[%c0_24, %c0_25] : memref<1x128xf32, #tpu.memory_space<vmem>>, vector<1x128xf32>
    %c0_26 = arith.constant 0 : index
    %c0_27 = arith.constant 0 : index
    %43 = vector.load %arg10[%c0_26, %c0_27] : memref<1x128xf32, #tpu.memory_space<vmem>>, vector<1x128xf32>
    %cst_28 = arith.constant dense<0.000000e+00> : vector<128xf32>
    %44 = vector.multi_reduction <add>, %41, %cst_28 [0] : vector<16x128xf32> to vector<128xf32>
    %45 = vector.shape_cast %44 : vector<128xf32> to vector<1x128xf32>
    %46 = arith.mulf %41, %41 : vector<16x128xf32>
    %cst_29 = arith.constant dense<0.000000e+00> : vector<128xf32>
    %47 = vector.multi_reduction <add>, %46, %cst_29 [0] : vector<16x128xf32> to vector<128xf32>
    %48 = vector.shape_cast %47 : vector<128xf32> to vector<1x128xf32>
    %cst_30 = arith.constant 6.250000e-02 : f32
    %49 = vector.broadcast %cst_30 : f32 to vector<1x128xf32>
    %50 = arith.mulf %45, %49 : vector<1x128xf32>
    %cst_31 = arith.constant 6.250000e-02 : f32
    %51 = vector.broadcast %cst_31 : f32 to vector<1x128xf32>
    %52 = arith.mulf %48, %51 : vector<1x128xf32>
    %53 = arith.mulf %50, %50 : vector<1x128xf32>
    %54 = arith.subf %52, %53 : vector<1x128xf32>
    %cst_32 = arith.constant 0.000000e+00 : f32
    %55 = vector.broadcast %cst_32 : f32 to vector<1x128xf32>
    %56 = arith.maximumf %54, %55 : vector<1x128xf32>
    %57 = vector.broadcast %50 : vector<1x128xf32> to vector<16x128xf32>
    %58 = arith.subf %41, %57 : vector<16x128xf32>
    %cst_33 = arith.constant 9.99999974E-6 : f32
    %59 = vector.broadcast %cst_33 : f32 to vector<1x128xf32>
    %60 = arith.addf %56, %59 : vector<1x128xf32>
    %61 = math.rsqrt %60 : vector<1x128xf32>
    %62 = vector.broadcast %61 : vector<1x128xf32> to vector<16x128xf32>
    %63 = arith.mulf %58, %62 : vector<16x128xf32>
    %64 = vector.broadcast %42 : vector<1x128xf32> to vector<16x128xf32>
    %65 = arith.mulf %63, %64 : vector<16x128xf32>
    %66 = vector.broadcast %43 : vector<1x128xf32> to vector<16x128xf32>
    %67 = arith.addf %65, %66 : vector<16x128xf32>
    %c0_34 = arith.constant 0 : index
    %c0_35 = arith.constant 0 : index
    %68 = vector.load %arg11[%c0_34, %c0_35] : memref<128x256xf32, #tpu.memory_space<vmem>>, vector<128x256xf32>
    %cst_36 = arith.constant dense<0.000000e+00> : vector<16x256xf32>
    %69 = tpu.matmul %67, %68, %cst_36 {dimension_numbers = #tpu.dot_dimension_numbers<[1], [0], [0], [1], [0, 0, 1, 1], [], []>} : vector<16x128xf32>, vector<128x256xf32>, vector<16x256xf32> -> vector<16x256xf32>
    %c0_37 = arith.constant 0 : index
    %c0_38 = arith.constant 0 : index
    %70 = vector.load %arg12[%c0_37, %c0_38] : memref<1x256xf32, #tpu.memory_space<vmem>>, vector<1x256xf32>
    %71 = vector.broadcast %70 : vector<1x256xf32> to vector<16x256xf32>
    %72 = arith.addf %69, %71 : vector<16x256xf32>
    %73 = vector.extract_strided_slice %72 {offsets = [0, 0], sizes = [16, 128], strides = [1, 1]} : vector<16x256xf32> to vector<16x128xf32>
    %74 = vector.extract_strided_slice %72 {offsets = [0, 128], sizes = [16, 128], strides = [1, 1]} : vector<16x256xf32> to vector<16x128xf32>
    %cst_39 = arith.constant 2.000000e+00 : f32
    %75 = vector.broadcast %cst_39 : f32 to vector<16x128xf32>
    %76 = arith.addf %73, %75 : vector<16x128xf32>
    %77 = arith.negf %76 : vector<16x128xf32>
    %78 = math.exp %77 : vector<16x128xf32>
    %cst_40 = arith.constant 1.000000e+00 : f32
    %79 = vector.broadcast %cst_40 : f32 to vector<16x128xf32>
    %80 = arith.addf %79, %78 : vector<16x128xf32>
    %81 = arith.divf %79, %80 : vector<16x128xf32>
    %82 = arith.mulf %81, %0 : vector<16x128xf32>
    %83 = arith.addf %82, %74 : vector<16x128xf32>
    %c0_41 = arith.constant 0 : index
    %c0_42 = arith.constant 0 : index
    %84 = vector.load %arg13[%c0_41, %c0_42] : memref<16x128xf32, #tpu.memory_space<vmem>>, vector<16x128xf32>
    tpu.vector_store %arg13[%c0_41, %c0_42], %83 {strides = array<i32>} : memref<16x128xf32, #tpu.memory_space<vmem>>, vector<16x128xf32>,
    %cst_43 = arith.constant 0.000000e+00 : f32
    %85 = vector.broadcast %cst_43 : f32 to vector<16x128xf32>
    %86 = arith.subf %85, %76 : vector<16x128xf32>
    %cst_44 = arith.constant 0.000000e+00 : f32
    %87 = vector.broadcast %cst_44 : f32 to vector<16x128xf32>
    %88 = arith.maximumf %86, %87 : vector<16x128xf32>
    %89 = math.absf %76 : vector<16x128xf32>
    %cst_45 = arith.constant 0.000000e+00 : f32
    %90 = vector.broadcast %cst_45 : f32 to vector<16x128xf32>
    %91 = arith.subf %90, %89 : vector<16x128xf32>
    %92 = math.exp %91 : vector<16x128xf32>
    %cst_46 = arith.constant 1.000000e+00 : f32
    %93 = vector.broadcast %cst_46 : f32 to vector<16x128xf32>
    %94 = arith.addf %93, %92 : vector<16x128xf32>
    %95 = math.log %94 : vector<16x128xf32>
    %96 = arith.addf %88, %95 : vector<16x128xf32>
    %cst_47 = arith.constant 0.000000e+00 : f32
    %97 = vector.broadcast %cst_47 : f32 to vector<16x128xf32>
    %98 = arith.subf %97, %96 : vector<16x128xf32>
    %cst_48 = arith.constant dense<0.000000e+00> : vector<16xf32>
    %99 = vector.multi_reduction <add>, %98, %cst_48 [1] : vector<16x128xf32> to vector<16xf32>
    %100 = vector.shape_cast %99 : vector<16xf32> to vector<16x1xf32>
    %c0_49 = arith.constant 0 : index
    %c0_50 = arith.constant 0 : index
    %101 = vector.load %arg14[%c0_49, %c0_50] : memref<16x1xf32, #tpu.memory_space<vmem>>, vector<16x1xf32>
    tpu.vector_store %arg14[%c0_49, %c0_50], %100 {strides = array<i32>} : memref<16x1xf32, #tpu.memory_space<vmem>>, vector<16x1xf32>,
    return
  }
}

</mosaic_0001>

<llo_original>
// kernel: tpu_custom_call.1
$region0: #{tpu_custom_call.1}
  #allocation0 [shape = 'u32[]', space=smem, size = 0x4, offset = 0x4, fixed_abs, tag = 'smem constant byte address 0x4 - core index']
  #allocation1 [shape = 'u32[144,128]{1,0:T(1,128)}', space=vmem, size = 0x12000, scoped, tag = 'internal scratch']
  %s0 = inlined_call_operand.vmem [shape: f32[16,128], index: 0, kind: input, shape index: {}]
  %s1 = inlined_call_operand.hbm [shape: f32[16,128], index: 1, kind: input, shape index: {}]
  %s2 = inlined_call_operand.vmem [shape: f32[16,1], index: 2, kind: input, shape index: {}]
  %s3 = inlined_call_operand.hbm [shape: f32[128,128], index: 3, kind: input, shape index: {}]
  %s4 = inlined_call_operand.vmem [shape: f32[1,128], index: 4, kind: input, shape index: {}]
  %s5 = inlined_call_operand.vmem [shape: f32[1,128], index: 5, kind: input, shape index: {}]
  %s6 = inlined_call_operand.vmem [shape: f32[1,128], index: 6, kind: input, shape index: {}]
  %s7 = inlined_call_operand.hbm [shape: f32[128,128], index: 7, kind: input, shape index: {}]
  %s8 = inlined_call_operand.vmem [shape: f32[1,128], index: 8, kind: input, shape index: {}]
  %s9 = inlined_call_operand.vmem [shape: f32[1,128], index: 9, kind: input, shape index: {}]
  %s10 = inlined_call_operand.vmem [shape: f32[1,128], index: 10, kind: input, shape index: {}]
  %s11 = inlined_call_operand.hbm [shape: f32[128,256], index: 11, kind: input, shape index: {}]
  %s12 = inlined_call_operand.vmem [shape: f32[1,256], index: 12, kind: input, shape index: {}]
  %s13 = inlined_call_operand.hbm [shape: f32[16,128], index: 13, kind: output, shape index: {0}]
  %s14 = inlined_call_operand.vmem [shape: f32[16,1], index: 14, kind: output, shape index: {1}]
  %15 = xla_tuple %s13, %s14
  %s16 = sld [smem:[#allocation0]]
  $region86: #{tpu_custom_call.1} parent=0
    _
  %s18 = ssub.s32 1, %s16
  %s19 = scalar_select 0, %s18, %s16
  $region1: #{tpu_custom_call.1} parent=0
    #allocation2 [shape = 'u8[8192]{0}', space=vmem, size = 0x2000, scoped, tag = 'input window, operand 1, single buffered']
    #allocation3 [shape = 's32[1]{0}', space=sflag, size = 0x4, scoped, tag = 'scoped memory for tpu_custom_call.1']
    #allocation4 [shape = 's32[1]{0}', space=sflag, size = 0x4, scoped, tag = 'scoped memory for tpu_custom_call.1']
    #allocation5 [shape = 'u8[65536]{0}', space=vmem, size = 0x10000, scoped, tag = 'input window, operand 3, single buffered']
    #allocation6 [shape = 's32[1]{0}', space=sflag, size = 0x4, scoped, tag = 'scoped memory for tpu_custom_call.1']
    #allocation7 [shape = 'u8[65536]{0}', space=vmem, size = 0x10000, scoped, tag = 'input window, operand 7, single buffered']
    #allocation8 [shape = 'u8[131072]{0}', space=vmem, size = 0x20000, scoped, tag = 'input window, operand 11, single buffered']
    #allocation9 [shape = 's32[1]{0}', space=sflag, size = 0x4, scoped, tag = 'scoped memory for tpu_custom_call.1']
    #allocation10 [shape = 'u8[8192]{0}', space=vmem, size = 0x2000, scoped, tag = 'output window, operand 0, single buffered']
    %20 = vsyncpa [#allocation3], 0
    %21 = vsyncpa [#allocation6], 0
    %22 = vsyncpa [#allocation9], 0
    %23 = vsyncpa [#allocation4], 0
    // Predicated region
    $region2: #{tpu_custom_call.1} parent=1 // pred_check
      _
    $region3: #{tpu_custom_call.1} parent=1 // pred_check_branch
      %25 = sbr.rel (0) target = $region5
    $region4: #{tpu_custom_call.1} parent=1 // pred_region
      _
    $region5: #{tpu_custom_call.1} parent=1 // pred_fallthru
      _
    // Predicated region
    $region6: #{tpu_custom_call.1} parent=1 // pred_check
      _
    $region7: #{tpu_custom_call.1} parent=1 // pred_check_branch
      %27 = sbr.rel (0) target = $region9
    $region8: #{tpu_custom_call.1} parent=1 // pred_region
      %s29 = ssub.s32 256, 256
      %30 = vsyncadd [#allocation3], %s29
      %s31 = sshll.u32 [#allocation2], 4
      %s32 = int_to_ptr.vmem [resolvable:$true] %s31
      %37 = dma.hbm_to_vmem [thread:$0]  %s1, 256, %s32, [#allocation3], 128, 128, 8
    $region9: #{tpu_custom_call.1} parent=1 // pred_fallthru
      _
    // Predicated region
    $region10: #{tpu_custom_call.1} parent=1 // pred_check
      _
    $region11: #{tpu_custom_call.1} parent=1 // pred_check_branch
      %39 = sbr.rel (0) target = $region13
    $region12: #{tpu_custom_call.1} parent=1 // pred_region
      _
    $region13: #{tpu_custom_call.1} parent=1 // pred_fallthru
      _
    // Predicated region
    $region14: #{tpu_custom_call.1} parent=1 // pred_check
      _
    $region15: #{tpu_custom_call.1} parent=1 // pred_check_branch
      %41 = sbr.rel (0) target = $region17
    $region16: #{tpu_custom_call.1} parent=1 // pred_region
      %s43 = ssub.s32 2048, 2048
      %44 = vsyncadd [#allocation6], %s43
      %s45 = sshll.u32 [#allocation5], 4
      %s46 = int_to_ptr.vmem [resolvable:$true] %s45
      %51 = dma.hbm_to_vmem [thread:$0]  %s3, 2048, %s46, [#allocation6], 128, 128, 8
    $region17: #{tpu_custom_call.1} parent=1 // pred_fallthru
      _
    // Predicated region
    $region18: #{tpu_custom_call.1} parent=1 // pred_check
      _
    $region19: #{tpu_custom_call.1} parent=1 // pred_check_branch
      %53 = sbr.rel (0) target = $region21
    $region20: #{tpu_custom_call.1} parent=1 // pred_region
      _
    $region21: #{tpu_custom_call.1} parent=1 // pred_fallthru
      _
    // Predicated region
    $region22: #{tpu_custom_call.1} parent=1 // pred_check
      _
    $region23: #{tpu_custom_call.1} parent=1 // pred_check_branch
      %55 = sbr.rel (0) target = $region25
    $region24: #{tpu_custom_call.1} parent=1 // pred_region
      _
    $region25: #{tpu_custom_call.1} parent=1 // pred_fallthru
      _
    // Predicated region
    $region26: #{tpu_custom_call.1} parent=1 // pred_check
      _
    $region27: #{tpu_custom_call.1} parent=1 // pred_check_branch
      %57 = sbr.rel (0) target = $region29
    $region28: #{tpu_custom_call.1} parent=1 // pred_region
      _
    $region29: #{tpu_custom_call.1} parent=1 // pred_fallthru
      _
    // Predicated region
    $region30: #{tpu_custom_call.1} parent=1 // pred_check
      _
    $region31: #{tpu_custom_call.1} parent=1 // pred_check_branch
      %59 = sbr.rel (0) target = $region33
    $region32: #{tpu_custom_call.1} parent=1 // pred_region
      %s61 = ssub.s32 2048, 2048
      %62 = vsyncadd [#allocation6], %s61
      %s63 = sshll.u32 [#allocation7], 4
      %s64 = int_to_ptr.vmem [resolvable:$true] %s63
      %69 = dma.hbm_to_vmem [thread:$0]  %s7, 2048, %s64, [#allocation6], 128, 128, 8
    $region33: #{tpu_custom_call.1} parent=1 // pred_fallthru
      _
    // Predicated region
    $region34: #{tpu_custom_call.1} parent=1 // pred_check
      _
    $region35: #{tpu_custom_call.1} parent=1 // pred_check_branch
      %71 = sbr.rel (0) target = $region37
    $region36: #{tpu_custom_call.1} parent=1 // pred_region
      _
    $region37: #{tpu_custom_call.1} parent=1 // pred_fallthru
      _
    // Predicated region
    $region38: #{tpu_custom_call.1} parent=1 // pred_check
      _
    $region39: #{tpu_custom_call.1} parent=1 // pred_check_branch
      %73 = sbr.rel (0) target = $region41
    $region40: #{tpu_custom_call.1} parent=1 // pred_region
      _
    $region41: #{tpu_custom_call.1} parent=1 // pred_fallthru
      _
    // Predicated region
    $region42: #{tpu_custom_call.1} parent=1 // pred_check
      _
    $region43: #{tpu_custom_call.1} parent=1 // pred_check_branch
      %75 = sbr.rel (0) target = $region45
    $region44: #{tpu_custom_call.1} parent=1 // pred_region
      _
    $region45: #{tpu_custom_call.1} parent=1 // pred_fallthru
      _
    // Predicated region
    $region46: #{tpu_custom_call.1} parent=1 // pred_check
      _
    $region47: #{tpu_custom_call.1} parent=1 // pred_check_branch
      %77 = sbr.rel (0) target = $region49
    $region48: #{tpu_custom_call.1} parent=1 // pred_region
      %s79 = ssub.s32 4096, 4096
      %80 = vsyncadd [#allocation9], %s79
      %s81 = sshll.u32 [#allocation8], 4
      %s82 = int_to_ptr.vmem [resolvable:$true] %s81
      %87 = dma.hbm_to_vmem [thread:$0]  %s11, 4096, %s82, [#allocation9], 256, 256, 16
    $region49: #{tpu_custom_call.1} parent=1 // pred_fallthru
      _
    // Predicated region
    $region50: #{tpu_custom_call.1} parent=1 // pred_check
      _
    $region51: #{tpu_custom_call.1} parent=1 // pred_check_branch
      %89 = sbr.rel (0) target = $region53
    $region52: #{tpu_custom_call.1} parent=1 // pred_region
      _
    $region53: #{tpu_custom_call.1} parent=1 // pred_fallthru
      _
    // Predicated region
    $region54: #{tpu_custom_call.1} parent=1 // pred_check
      _
    $region55: #{tpu_custom_call.1} parent=1 // pred_check_branch
      %91 = sbr.rel (0) target = $region57
    $region56: #{tpu_custom_call.1} parent=1 // pred_region
      %92 = dma.done [#allocation3], 256
    $region57: #{tpu_custom_call.1} parent=1 // pred_fallthru
      _
    // Predicated region
    $region58: #{tpu_custom_call.1} parent=1 // pred_check
      _
    $region59: #{tpu_custom_call.1} parent=1 // pred_check_branch
      %94 = sbr.rel (0) target = $region61
    $region60: #{tpu_custom_call.1} parent=1 // pred_region
      %95 = dma.done [#allocation6], 2048
    $region61: #{tpu_custom_call.1} parent=1 // pred_fallthru
      _
    // Predicated region
    $region62: #{tpu_custom_call.1} parent=1 // pred_check
      _
    $region63: #{tpu_custom_call.1} parent=1 // pred_check_branch
      %97 = sbr.rel (0) target = $region65
    $region64: #{tpu_custom_call.1} parent=1 // pred_region
      %98 = dma.done [#allocation6], 2048
    $region65: #{tpu_custom_call.1} parent=1 // pred_fallthru
      _
    // Predicated region
    $region66: #{tpu_custom_call.1} parent=1 // pred_check
      _
    $region67: #{tpu_custom_call.1} parent=1 // pred_check_branch
      %100 = sbr.rel (0) target = $region69
    $region68: #{tpu_custom_call.1} parent=1 // pred_region
      %101 = dma.done [#allocation9], 4096
    $region69: #{tpu_custom_call.1} parent=1 // pred_fallthru
      _
    %v102 = vld [vmem:[#allocation2] sm:$0xff]
    %v103 = vld [vmem:[#allocation2 + $0x8] sm:$0xff]
    %v104 = vld [vmem:[%s0] sm:$0xff]
    %v105 = vld [vmem:[%s0 + $0x8] sm:$0xff]
    %v106 = vld [vmem:[#allocation5] sm:$0xff]
    %v107 = vld [vmem:[#allocation5 + $0x8] sm:$0xff]
    %v108 = vld [vmem:[#allocation5 + $0x10] sm:$0xff]
    %v109 = vld [vmem:[#allocation5 + $0x18] sm:$0xff]
    %v110 = vld [vmem:[#allocation5 + $0x20] sm:$0xff]
    %v111 = vld [vmem:[#allocation5 + $0x28] sm:$0xff]
    %v112 = vld [vmem:[#allocation5 + $0x30] sm:$0xff]
    %v113 = vld [vmem:[#allocation5 + $0x38] sm:$0xff]
    %v114 = vld [vmem:[#allocation5 + $0x40] sm:$0xff]
    %v115 = vld [vmem:[#allocation5 + $0x48] sm:$0xff]
    %v116 = vld [vmem:[#allocation5 + $0x50] sm:$0xff]
    %v117 = vld [vmem:[#allocation5 + $0x58] sm:$0xff]
    %v118 = vld [vmem:[#allocation5 + $0x60] sm:$0xff]
    %v119 = vld [vmem:[#allocation5 + $0x68] sm:$0xff]
    %v120 = vld [vmem:[#allocation5 + $0x70] sm:$0xff]
    %v121 = vld [vmem:[#allocation5 + $0x78] sm:$0xff]
    %v122 = vld [vmem:[%s4] sm:$0x1]
    %v124 = vlaneseq
    %v125 = vshrl.u32 %v124, 7
    %v126 = vsub.s32 0, %v125
    %v127 = vrot.slane %v122, %v126
    %129 = vmatprep.subr.mxu0 0.0
    %130 = vmatpush1.msra.mxu0 %v106
    %131 = vmatprep.subr.mxu0 0.0
    %132 = vmatpush1.msra.mxu0 %v107
    %133 = vmatprep.subr.mxu0 0.0
    %134 = vmatpush1.msra.mxu0 %v108
    %135 = vmatprep.subr.mxu0 0.0
    %136 = vmatpush1.msra.mxu0 %v109
    %137 = vmatprep.subr.mxu0 0.0
    %138 = vmatpush1.msra.mxu0 %v110
    %139 = vmatprep.subr.mxu0 0.0
    %140 = vmatpush1.msra.mxu0 %v111
    %141 = vmatprep.subr.mxu0 0.0
    %142 = vmatpush1.msra.mxu0 %v112
    %143 = vmatprep.subr.mxu0 0.0
    %144 = vmatpush1.msra.mxu0 %v113
    %145 = vmatprep.subr.mxu0 0.0
    %146 = vmatpush1.msra.mxu0 %v114
    %147 = vmatprep.subr.mxu0 0.0
    %148 = vmatpush1.msra.mxu0 %v115
    %149 = vmatprep.subr.mxu0 0.0
    %150 = vmatpush1.msra.mxu0 %v116
    %151 = vmatprep.subr.mxu0 0.0
    %152 = vmatpush1.msra.mxu0 %v117
    %153 = vmatprep.subr.mxu0 0.0
    %154 = vmatpush1.msra.mxu0 %v118
    %155 = vmatprep.subr.mxu0 0.0
    %156 = vmatpush1.msra.mxu0 %v119
    %157 = vmatprep.subr.mxu0 0.0
    %158 = vmatpush1.msra.mxu0 %v120
    %159 = vmatprep.subr.mxu0 0.0
    %160 = vmatpush1.msra.mxu0 %v121
    %161 = vmatprep.subr.mxu0 0.0
    %162 = vmatpush1.msra.mxu0 0.0
    %163 = vmatprep.subr.mxu0 0.0
    %164 = vmatpush1.msra.mxu0 0.0
    %165 = vmatprep.subr.mxu0 0.0
    %166 = vmatpush1.msra.mxu0 0.0
    %167 = vmatprep.subr.mxu0 0.0
    %168 = vmatpush1.msra.mxu0 0.0
    %169 = vmatprep.subr.mxu0 0.0
    %170 = vmatpush1.msra.mxu0 0.0
    %171 = vmatprep.subr.mxu0 0.0
    %172 = vmatpush1.msra.mxu0 0.0
    %173 = vmatprep.subr.mxu0 0.0
    %174 = vmatpush1.msra.mxu0 0.0
    %175 = vmatprep.subr.mxu0 0.0
    %176 = vmatpush1.msra.mxu0 0.0
    %177 = vmatprep.subr.mxu0 0.0
    %178 = vmatpush1.msra.mxu0 0.0
    %179 = vmatprep.subr.mxu0 0.0
    %180 = vmatpush1.msra.mxu0 0.0
    %181 = vmatprep.subr.mxu0 0.0
    %182 = vmatpush1.msra.mxu0 0.0
    %183 = vmatprep.subr.mxu0 0.0
    %184 = vmatpush1.msra.mxu0 0.0
    %185 = vmatprep.subr.mxu0 0.0
    %186 = vmatpush1.msra.mxu0 0.0
    %187 = vmatprep.subr.mxu0 0.0
    %188 = vmatpush1.msra.mxu0 0.0
    %189 = vmatprep.subr.mxu0 0.0
    %190 = vmatpush1.msra.mxu0 0.0
    %191 = vmatprep.subr.mxu0 0.0
    %192 = vmatpush1.msra.mxu0 0.0
    %193 = vmatprep.mubr.f32.mxu0 0.0
    %194 = vmatmul.mubr.f32.gmra.mrb[0].mxu0 %v104
    %v195 = vpop.f32.mrb[0].mxu0
    %v196 = vadd.f32 %v127, %v195
    %v197 = vpop.f32.mrb[0].mxu0
    %198 = vmatprep.mubr.f32.mxu0 0.0
    %199 = vmatmul.mubr.f32.gmra.mrb[0].mxu0 %v105
    %v200 = vpop.f32.mrb[0].mxu0
    %v201 = vadd.f32 %v127, %v200
    %v202 = vpop.f32.mrb[0].mxu0
    %203 = vdwg.mxu0
    %v204 = vmax.f32 %v196, 0.0
    %v205 = vmax.f32 %v201, 0.0
    %v206 = vld [vmem:[%s5] sm:$0x1]
    %v207 = vld [vmem:[%s6] sm:$0x1]
    %v208 = vadd.f32 %v204, %v205
    %v209 = vrot.slane %v208, 4
    %v210 = vadd.f32 %v208, %v209
    %v211 = vrot.slane %v210, 2
    %v212 = vadd.f32 %v210, %v211
    %v213 = vrot.slane %v212, 1
    %v214 = vadd.f32 %v212, %v213
    %v215 = vmul.f32 %v204, %v204
    %v216 = vmul.f32 %v205, %v205
    %v217 = vadd.f32 %v215, %v216
    %v218 = vrot.slane %v217, 4
    %v219 = vadd.f32 %v217, %v218
    %v220 = vrot.slane %v219, 2
    %v221 = vadd.f32 %v219, %v220
    %v222 = vrot.slane %v221, 1
    %v223 = vadd.f32 %v221, %v222
    %v224 = vmul.f32 %v214, 0.0625
    %v225 = vmul.f32 %v223, 0.0625
    %v226 = vmul.f32 %v224, %v224
    %v227 = vsub.f32 %v225, %v226
    %v228 = vmax.f32 %v227, 0.0
    %v229 = vsub.f32 %v204, %v224
    %v230 = vsub.f32 %v205, %v224
    %v231 = vadd.f32 %v228, 1e-05
    %v232 = vrsqrt.pop %v231
    %v233 = vmul.f32 %v229, %v232
    %v234 = vmul.f32 %v230, %v232
    %v236 = vlaneseq
    %v237 = vshrl.u32 %v236, 7
    %v238 = vsub.s32 0, %v237
    %v239 = vrot.slane %v206, %v238
    %v241 = vmul.f32 %v233, %v239
    %v242 = vmul.f32 %v234, %v239
    %v244 = vlaneseq
    %v245 = vshrl.u32 %v244, 7
    %v246 = vsub.s32 0, %v245
    %v247 = vrot.slane %v207, %v246
    %v249 = vadd.f32 %v241, %v247
    %v250 = vadd.f32 %v242, %v247
    %v251 = vld [vmem:[#allocation7] sm:$0xff]
    %v252 = vld [vmem:[#allocation7 + $0x8] sm:$0xff]
    %v253 = vld [vmem:[#allocation7 + $0x10] sm:$0xff]
    %v254 = vld [vmem:[#allocation7 + $0x18] sm:$0xff]
    %v255 = vld [vmem:[#allocation7 + $0x20] sm:$0xff]
    %v256 = vld [vmem:[#allocation7 + $0x28] sm:$0xff]
    %v257 = vld [vmem:[#allocation7 + $0x30] sm:$0xff]
    %v258 = vld [vmem:[#allocation7 + $0x38] sm:$0xff]
    %v259 = vld [vmem:[#allocation7 + $0x40] sm:$0xff]
    %v260 = vld [vmem:[#allocation7 + $0x48] sm:$0xff]
    %v261 = vld [vmem:[#allocation7 + $0x50] sm:$0xff]
    %v262 = vld [vmem:[#allocation7 + $0x58] sm:$0xff]
    %v263 = vld [vmem:[#allocation7 + $0x60] sm:$0xff]
    %v264 = vld [vmem:[#allocation7 + $0x68] sm:$0xff]
    %v265 = vld [vmem:[#allocation7 + $0x70] sm:$0xff]
    %v266 = vld [vmem:[#allocation7 + $0x78] sm:$0xff]
    %v267 = vld [vmem:[%s8] sm:$0x1]
    %v269 = vlaneseq
    %v270 = vshrl.u32 %v269, 7
    %v271 = vsub.s32 0, %v270
    %v272 = vrot.slane %v267, %v271
    %274 = vmatprep.subr.mxu0 0.0
    %275 = vmatpush1.msra.mxu0 %v251
    %276 = vmatprep.subr.mxu0 0.0
    %277 = vmatpush1.msra.mxu0 %v252
    %278 = vmatprep.subr.mxu0 0.0
    %279 = vmatpush1.msra.mxu0 %v253
    %280 = vmatprep.subr.mxu0 0.0
    %281 = vmatpush1.msra.mxu0 %v254
    %282 = vmatprep.subr.mxu0 0.0
    %283 = vmatpush1.msra.mxu0 %v255
    %284 = vmatprep.subr.mxu0 0.0
    %285 = vmatpush1.msra.mxu0 %v256
    %286 = vmatprep.subr.mxu0 0.0
    %287 = vmatpush1.msra.mxu0 %v257
    %288 = vmatprep.subr.mxu0 0.0
    %289 = vmatpush1.msra.mxu0 %v258
    %290 = vmatprep.subr.mxu0 0.0
    %291 = vmatpush1.msra.mxu0 %v259
    %292 = vmatprep.subr.mxu0 0.0
    %293 = vmatpush1.msra.mxu0 %v260
    %294 = vmatprep.subr.mxu0 0.0
    %295 = vmatpush1.msra.mxu0 %v261
    %296 = vmatprep.subr.mxu0 0.0
    %297 = vmatpush1.msra.mxu0 %v262
    %298 = vmatprep.subr.mxu0 0.0
    %299 = vmatpush1.msra.mxu0 %v263
    %300 = vmatprep.subr.mxu0 0.0
    %301 = vmatpush1.msra.mxu0 %v264
    %302 = vmatprep.subr.mxu0 0.0
    %303 = vmatpush1.msra.mxu0 %v265
    %304 = vmatprep.subr.mxu0 0.0
    %305 = vmatpush1.msra.mxu0 %v266
    %306 = vmatprep.subr.mxu0 0.0
    %307 = vmatpush1.msra.mxu0 0.0
    %308 = vmatprep.subr.mxu0 0.0
    %309 = vmatpush1.msra.mxu0 0.0
    %310 = vmatprep.subr.mxu0 0.0
    %311 = vmatpush1.msra.mxu0 0.0
    %312 = vmatprep.subr.mxu0 0.0
    %313 = vmatpush1.msra.mxu0 0.0
    %314 = vmatprep.subr.mxu0 0.0
    %315 = vmatpush1.msra.mxu0 0.0
    %316 = vmatprep.subr.mxu0 0.0
    %317 = vmatpush1.msra.mxu0 0.0
    %318 = vmatprep.subr.mxu0 0.0
    %319 = vmatpush1.msra.mxu0 0.0
    %320 = vmatprep.subr.mxu0 0.0
    %321 = vmatpush1.msra.mxu0 0.0
    %322 = vmatprep.subr.mxu0 0.0
    %323 = vmatpush1.msra.mxu0 0.0
    %324 = vmatprep.subr.mxu0 0.0
    %325 = vmatpush1.msra.mxu0 0.0
    %326 = vmatprep.subr.mxu0 0.0
    %327 = vmatpush1.msra.mxu0 0.0
    %328 = vmatprep.subr.mxu0 0.0
    %329 = vmatpush1.msra.mxu0 0.0
    %330 = vmatprep.subr.mxu0 0.0
    %331 = vmatpush1.msra.mxu0 0.0
    %332 = vmatprep.subr.mxu0 0.0
    %333 = vmatpush1.msra.mxu0 0.0
    %334 = vmatprep.subr.mxu0 0.0
    %335 = vmatpush1.msra.mxu0 0.0
    %336 = vmatprep.subr.mxu0 0.0
    %337 = vmatpush1.msra.mxu0 0.0
    %338 = vmatprep.mubr.f32.mxu0 0.0
    %339 = vmatmul.mubr.f32.gmra.mrb[0].mxu0 %v249
    %v340 = vpop.f32.mrb[0].mxu0
    %v341 = vadd.f32 %v272, %v340
    %v342 = vpop.f32.mrb[0].mxu0
    %343 = vmatprep.mubr.f32.mxu0 0.0
    %344 = vmatmul.mubr.f32.gmra.mrb[0].mxu0 %v250
    %v345 = vpop.f32.mrb[0].mxu0
    %v346 = vadd.f32 %v272, %v345
    %v347 = vpop.f32.mrb[0].mxu0
    %348 = vdwg.mxu0
    %v349 = vmax.f32 %v341, 0.0
    %v350 = vmax.f32 %v346, 0.0
    %v351 = vld [vmem:[%s9] sm:$0x1]
    %v352 = vld [vmem:[%s10] sm:$0x1]
    %v353 = vadd.f32 %v349, %v350
    %v354 = vrot.slane %v353, 4
    %v355 = vadd.f32 %v353, %v354
    %v356 = vrot.slane %v355, 2
    %v357 = vadd.f32 %v355, %v356
    %v358 = vrot.slane %v357, 1
    %v359 = vadd.f32 %v357, %v358
    %v360 = vmul.f32 %v349, %v349
    %v361 = vmul.f32 %v350, %v350
    %v362 = vadd.f32 %v360, %v361
    %v363 = vrot.slane %v362, 4
    %v364 = vadd.f32 %v362, %v363
    %v365 = vrot.slane %v364, 2
    %v366 = vadd.f32 %v364, %v365
    %v367 = vrot.slane %v366, 1
    %v368 = vadd.f32 %v366, %v367
    %v369 = vmul.f32 %v359, 0.0625
    %v370 = vmul.f32 %v368, 0.0625
    %v371 = vmul.f32 %v369, %v369
    %v372 = vsub.f32 %v370, %v371
    %v373 = vmax.f32 %v372, 0.0
    %v374 = vsub.f32 %v349, %v369
    %v375 = vsub.f32 %v350, %v369
    %v376 = vadd.f32 %v373, 1e-05
    %v377 = vrsqrt.pop %v376
    %v378 = vmul.f32 %v374, %v377
    %v379 = vmul.f32 %v375, %v377
    %v381 = vlaneseq
    %v382 = vshrl.u32 %v381, 7
    %v383 = vsub.s32 0, %v382
    %v384 = vrot.slane %v351, %v383
    %v386 = vmul.f32 %v378, %v384
    %v387 = vmul.f32 %v379, %v384
    %v389 = vlaneseq
    %v390 = vshrl.u32 %v389, 7
    %v391 = vsub.s32 0, %v390
    %v392 = vrot.slane %v352, %v391
    %v394 = vadd.f32 %v386, %v392
    %v395 = vadd.f32 %v387, %v392
    %v396 = vld [vmem:[#allocation8] sm:$0xff]
    %v397 = vld [vmem:[#allocation8 + $0x8] sm:$0xff]
    %v398 = vld [vmem:[#allocation8 + $0x10] sm:$0xff]
    %v399 = vld [vmem:[#allocation8 + $0x18] sm:$0xff]
    %v400 = vld [vmem:[#allocation8 + $0x20] sm:$0xff]
    %v401 = vld [vmem:[#allocation8 + $0x28] sm:$0xff]
    %v402 = vld [vmem:[#allocation8 + $0x30] sm:$0xff]
    %v403 = vld [vmem:[#allocation8 + $0x38] sm:$0xff]
    %v404 = vld [vmem:[#allocation8 + $0x40] sm:$0xff]
    %v405 = vld [vmem:[#allocation8 + $0x48] sm:$0xff]
    %v406 = vld [vmem:[#allocation8 + $0x50] sm:$0xff]
    %v407 = vld [vmem:[#allocation8 + $0x58] sm:$0xff]
    %v408 = vld [vmem:[#allocation8 + $0x60] sm:$0xff]
    %v409 = vld [vmem:[#allocation8 + $0x68] sm:$0xff]
    %v410 = vld [vmem:[#allocation8 + $0x70] sm:$0xff]
    %v411 = vld [vmem:[#allocation8 + $0x78] sm:$0xff]
    %v412 = vld [vmem:[#allocation8 + $0x80] sm:$0xff]
    %v413 = vld [vmem:[#allocation8 + $0x88] sm:$0xff]
    %v414 = vld [vmem:[#allocation8 + $0x90] sm:$0xff]
    %v415 = vld [vmem:[#allocation8 + $0x98] sm:$0xff]
    %v416 = vld [vmem:[#allocation8 + $0xa0] sm:$0xff]
    %v417 = vld [vmem:[#allocation8 + $0xa8] sm:$0xff]
    %v418 = vld [vmem:[#allocation8 + $0xb0] sm:$0xff]
    %v419 = vld [vmem:[#allocation8 + $0xb8] sm:$0xff]
    %v420 = vld [vmem:[#allocation8 + $0xc0] sm:$0xff]
    %v421 = vld [vmem:[#allocation8 + $0xc8] sm:$0xff]
    %v422 = vld [vmem:[#allocation8 + $0xd0] sm:$0xff]
    %v423 = vld [vmem:[#allocation8 + $0xd8] sm:$0xff]
    %v424 = vld [vmem:[#allocation8 + $0xe0] sm:$0xff]
    %v425 = vld [vmem:[#allocation8 + $0xe8] sm:$0xff]
    %v426 = vld [vmem:[#allocation8 + $0xf0] sm:$0xff]
    %v427 = vld [vmem:[#allocation8 + $0xf8] sm:$0xff]
    %v428 = vld [vmem:[%s12] sm:$0x3]
    %v430 = vlaneseq
    %v431 = vshrl.u32 %v430, 7
    %v432 = vsub.s32 0, %v431
    %v433 = vrot.slane %v428, %v432
    %v434 = vlaneseq
    %v435 = vshrl.u32 %v434, 7
    %v436 = vsub.s32 1, %v435
    %v437 = vrot.slane %v428, %v436
    %440 = vmatprep.subr.mxu0 %v397
    %441 = vmatpush1.msra.mxu0 %v396
    %442 = vmatprep.subr.mxu0 %v399
    %443 = vmatpush1.msra.mxu0 %v398
    %444 = vmatprep.subr.mxu0 %v401
    %445 = vmatpush1.msra.mxu0 %v400
    %446 = vmatprep.subr.mxu0 %v403
    %447 = vmatpush1.msra.mxu0 %v402
    %448 = vmatprep.subr.mxu0 %v405
    %449 = vmatpush1.msra.mxu0 %v404
    %450 = vmatprep.subr.mxu0 %v407
    %451 = vmatpush1.msra.mxu0 %v406
    %452 = vmatprep.subr.mxu0 %v409
    %453 = vmatpush1.msra.mxu0 %v408
    %454 = vmatprep.subr.mxu0 %v411
    %455 = vmatpush1.msra.mxu0 %v410
    %456 = vmatprep.subr.mxu0 %v413
    %457 = vmatpush1.msra.mxu0 %v412
    %458 = vmatprep.subr.mxu0 %v415
    %459 = vmatpush1.msra.mxu0 %v414
    %460 = vmatprep.subr.mxu0 %v417
    %461 = vmatpush1.msra.mxu0 %v416
    %462 = vmatprep.subr.mxu0 %v419
    %463 = vmatpush1.msra.mxu0 %v418
    %464 = vmatprep.subr.mxu0 %v421
    %465 = vmatpush1.msra.mxu0 %v420
    %466 = vmatprep.subr.mxu0 %v423
    %467 = vmatpush1.msra.mxu0 %v422
    %468 = vmatprep.subr.mxu0 %v425
    %469 = vmatpush1.msra.mxu0 %v424
    %470 = vmatprep.subr.mxu0 %v427
    %471 = vmatpush1.msra.mxu0 %v426
    %472 = vmatprep.subr.mxu0 0.0
    %473 = vmatpush1.msra.mxu0 0.0
    %474 = vmatprep.subr.mxu0 0.0
    %475 = vmatpush1.msra.mxu0 0.0
    %476 = vmatprep.subr.mxu0 0.0
    %477 = vmatpush1.msra.mxu0 0.0
    %478 = vmatprep.subr.mxu0 0.0
    %479 = vmatpush1.msra.mxu0 0.0
    %480 = vmatprep.subr.mxu0 0.0
    %481 = vmatpush1.msra.mxu0 0.0
    %482 = vmatprep.subr.mxu0 0.0
    %483 = vmatpush1.msra.mxu0 0.0
    %484 = vmatprep.subr.mxu0 0.0
    %485 = vmatpush1.msra.mxu0 0.0
    %486 = vmatprep.subr.mxu0 0.0
    %487 = vmatpush1.msra.mxu0 0.0
    %488 = vmatprep.subr.mxu0 0.0
    %489 = vmatpush1.msra.mxu0 0.0
    %490 = vmatprep.subr.mxu0 0.0
    %491 = vmatpush1.msra.mxu0 0.0
    %492 = vmatprep.subr.mxu0 0.0
    %493 = vmatpush1.msra.mxu0 0.0
    %494 = vmatprep.subr.mxu0 0.0
    %495 = vmatpush1.msra.mxu0 0.0
    %496 = vmatprep.subr.mxu0 0.0
    %497 = vmatpush1.msra.mxu0 0.0
    %498 = vmatprep.subr.mxu0 0.0
    %499 = vmatpush1.msra.mxu0 0.0
    %500 = vmatprep.subr.mxu0 0.0
    %501 = vmatpush1.msra.mxu0 0.0
    %502 = vmatprep.subr.mxu0 0.0
    %503 = vmatpush1.msra.mxu0 0.0
    %504 = vmatprep.mubr.f32.mxu0 0.0
    %505 = vmatmul.mubr.f32.gmra.mrb[0].mxu0 %v394
    %v506 = vpop.f32.mrb[0].mxu0
    %v507 = vadd.f32 %v433, %v506
    %v508 = vpop.f32.mrb[0].mxu0
    %v509 = vadd.f32 %v437, %v508
    %510 = vmatprep.mubr.f32.mxu0 0.0
    %511 = vmatmul.mubr.f32.gmra.mrb[0].mxu0 %v395
    %v512 = vpop.f32.mrb[0].mxu0
    %v513 = vadd.f32 %v433, %v512
    %v514 = vpop.f32.mrb[0].mxu0
    %v515 = vadd.f32 %v437, %v514
    %516 = vdwg.mxu0
    %v517 = vadd.f32 %v507, 2.0
    %v518 = vadd.f32 %v513, 2.0
    %v519 = vxor.u32 %v517, 2147483648
    %v520 = vxor.u32 %v518, 2147483648
    %v521 = vmul.f32 %v519, 1.442695
    %v522 = vpow.pop %v521
    %v523 = vmul.f32 %v520, 1.442695
    %v524 = vpow.pop %v523
    %v525 = vadd.f32 %v522, 1.0
    %v526 = vadd.f32 %v524, 1.0
    %v527 = vrcp.pop %v525
    %v528 = vmul.f32 1.0, %v527
    %v529 = vrcp.pop %v526
    %v530 = vmul.f32 1.0, %v529
    %v531 = vmul.f32 %v528, %v102
    %v532 = vmul.f32 %v530, %v103
    %v533 = vadd.f32 %v531, %v509
    %v534 = vadd.f32 %v532, %v515
    %535 = vst [vmem:[#allocation10] sm:$0xff] %v533
    %536 = vst [vmem:[#allocation10 + $0x8] sm:$0xff] %v534
    %v537 = vsub.f32 0.0, %v517
    %v538 = vsub.f32 0.0, %v518
    %v539 = vmax.f32 %v537, 0.0
    %v540 = vmax.f32 %v538, 0.0
    %v541 = vand.u32 2147483647, %v517
    %v542 = vand.u32 2147483647, %v518
    %v543 = vsub.f32 0.0, %v541
    %v544 = vsub.f32 0.0, %v542
    %v545 = vmul.f32 %v543, 1.442695
    %v546 = vpow.pop %v545
    %v547 = vmul.f32 %v544, 1.442695
    %v548 = vpow.pop %v547
    %v549 = vadd.f32 %v546, 1.0
    %v550 = vadd.f32 %v548, 1.0
    %v551 = vlog2.pop %v549
    %v552 = vmul.f32 %v551, 0.6931472
    %v553 = vlog2.pop %v550
    %v554 = vmul.f32 %v553, 0.6931472
    %v555 = vadd.f32 %v539, %v552
    %v556 = vadd.f32 %v540, %v554
    %v557 = vsub.f32 0.0, %v555
    %v558 = vsub.f32 0.0, %v556
    %559 = vadd.xlane.f32.xlu0 %v557
    %v560 = vpop.xlane.xlu0 %559
    %561 = vadd.xlane.f32.xlu0 %v558
    %v562 = vpop.xlane.xlu0 %561
    %vm563 = vcmask 7168
    %564 = vst.msk [vmem:[%s14] sm:$0xff] %vm563, %v560
    %565 = vst.msk [vmem:[%s14 + $0x8] sm:$0xff] %vm563, %v562
    // Predicated region
    $region70: #{tpu_custom_call.1} parent=1 // pred_check
      _
    $region71: #{tpu_custom_call.1} parent=1 // pred_check_branch
      %567 = sbr.rel (0) target = $region73
    $region72: #{tpu_custom_call.1} parent=1 // pred_region
      %s569 = ssub.s32 256, 256
      %570 = vsyncadd [#allocation4], %s569
      %s571 = sshll.u32 [#allocation10], 4
      %s572 = int_to_ptr.vmem [resolvable:$true] %s571
      %577 = dma.vmem_to_hbm [thread:$0]  %s572, 256, %s13, [#allocation4], 128, 128, 8
    $region73: #{tpu_custom_call.1} parent=1 // pred_fallthru
      _
    // Predicated region
    $region74: #{tpu_custom_call.1} parent=1 // pred_check
      _
    $region75: #{tpu_custom_call.1} parent=1 // pred_check_branch
      %579 = sbr.rel (0) target = $region77
    $region76: #{tpu_custom_call.1} parent=1 // pred_region
      _
    $region77: #{tpu_custom_call.1} parent=1 // pred_fallthru
      _
    // Predicated region
    $region78: #{tpu_custom_call.1} parent=1 // pred_check
      _
    $region79: #{tpu_custom_call.1} parent=1 // pred_check_branch
      %581 = sbr.rel (0) target = $region81
    $region80: #{tpu_custom_call.1} parent=1 // pred_region
      %582 = dma.done [#allocation4], 256
    $region81: #{tpu_custom_call.1} parent=1 // pred_fallthru
      _
    // Predicated region
    $region82: #{tpu_custom_call.1} parent=1 // pred_check
      _
    $region83: #{tpu_custom_call.1} parent=1 // pred_check_branch
      %584 = sbr.rel (0) target = $region85
    $region84: #{tpu_custom_call.1} parent=1 // pred_region
      _
    $region85: #{tpu_custom_call.1} parent=1 // pred_fallthru
      _
    %585 = vsyncpa [#allocation3], 1
    %586 = vsyncpa [#allocation6], 1
    %587 = vsyncpa [#allocation9], 1
    %588 = vsyncpa [#allocation4], 1

</llo_original>
